<compile_context>
chip_gen: v7x
topology: tpu7x:2x2x1
jax: 0.10.0
libtpu: 0.0.40
codegen_flags: <defaults>
</compile_context>

<pallas_src>
import functools
import math

import jax
import jax.numpy as jnp
from jax.experimental import pallas as pl
from jax.experimental.pallas import tpu as pltpu

SLICE_END = 4096                 # hard-coded in the PyTorch module: a[:, 0:4096]

_LANE = 128                      # vreg lane width
_SUBLANE = 8                     # vreg sublane count (f32)
_TARGET_BLOCK_BYTES = 1 << 20    # ~1 MiB useful data per grid step
_MIN_GRID_BLOCKS = 4             # enough blocks for megacore sharding on v7x


def _cdiv(a, b):
    return -(-a // b)


def _round_up(v, m):
    return _cdiv(v, m) * m


def _round_down(v, m):
    return (v // m) * m


# ---------------------------------------------------------------------------
# Kernels
# ---------------------------------------------------------------------------
def _clamp_kernel(x_ref, o_ref):
    """Elementwise ReLU6 (clamp to [0, 6]) on one dense block."""
    o_ref[...] = jnp.clip(x_ref[...], 0, 6).astype(o_ref.dtype)


def _cat_clamp_kernel(x1_ref, x2_ref, o_ref, *, nblk1):
    """Clamp one output block; the first `nblk1` row-blocks come from x1, the
    rest from x2.  The output BlockSpec already places each block at its final
    offset, so no post-hoc concatenate is needed."""
    r = pl.program_id(1)

    @pl.when(r < nblk1)
    def _():
        o_ref[...] = jnp.clip(x1_ref[...], 0, 6).astype(o_ref.dtype)

    @pl.when(r >= nblk1)
    def _():
        o_ref[...] = jnp.clip(x2_ref[...], 0, 6).astype(o_ref.dtype)


# ---------------------------------------------------------------------------
# Tiling helpers
# ---------------------------------------------------------------------------
def _pick_lane_width(sizes, c_max=1024):
    """Largest multiple of 128 (capped) dividing every size, or None."""
    g = 0
    for s in sizes:
        g = math.gcd(g, int(s))
    if g % _LANE != 0:
        return None
    for k in range(c_max // _LANE, 0, -1):
        cand = _LANE * k
        if g % cand == 0:
            return cand
    return None


def _pick_row_block(rows, lane_width, itemsize, min_blocks=_MIN_GRID_BLOCKS):
    """Rows per block: multiple of 8 (dense sublanes), ~1 MiB per block, but
    small enough to give >= min_blocks grid steps along this axis."""
    rb = max(_SUBLANE,
             _round_down(_TARGET_BLOCK_BYTES // (lane_width * itemsize),
                         _SUBLANE))
    cap = max(_SUBLANE, _round_up(_cdiv(rows, max(1, min_blocks)), _SUBLANE))
    return min(rb, cap, _round_up(rows, _SUBLANE))


def _pick_dividing_row_block(boundary_rows, lane_width, itemsize):
    """Largest multiple-of-8 row block (<= ~1 MiB) dividing boundary_rows, so
    output blocks land exactly on the concat boundary."""
    target = max(_SUBLANE,
                 _round_down(_TARGET_BLOCK_BYTES // (lane_width * itemsize),
                             _SUBLANE))
    start = _round_down(min(target, boundary_rows), _SUBLANE)
    for rb in range(start, 0, -_SUBLANE):
        if boundary_rows % rb == 0:
            return rb
    return _SUBLANE


# ---------------------------------------------------------------------------
# Single-source clamp (output comes entirely from one input's row prefix)
# ---------------------------------------------------------------------------
def _clamp_full_flat(x):
    """clamp(x, 0, 6) with x fully flattened (batch folded) to (rows, C)."""
    total = math.prod(x.shape)
    c = _pick_lane_width([total])
    if c is None:
        return None
    itemsize = jnp.dtype(x.dtype).itemsize
    rows = total // c
    rb = _pick_row_block(rows, c, itemsize)
    xf = jnp.reshape(x, (rows, c))                       # free row-major view
    out = pl.pallas_call(
        _clamp_kernel,
        out_shape=jax.ShapeDtypeStruct((rows, c), x.dtype),
        grid_spec=pl.GridSpec(
            grid=(_cdiv(rows, rb),),
            in_specs=[pl.BlockSpec((rb, c), lambda r: (r, 0))],
            out_specs=pl.BlockSpec((rb, c), lambda r: (r, 0)),
        ),
        compiler_params=pltpu.CompilerParams(
            dimension_semantics=("parallel",)),
    )(xf)
    return jnp.reshape(out, x.shape)


def _clamp_prefix_aligned(x, rows, c):
    """clamp(x[:, :rows, :], 0, 6) via a lane/sublane dense (B, R, C) view."""
    B, S, D = x.shape
    itemsize = jnp.dtype(x.dtype).itemsize
    p = (rows * D) // c                                  # output rows per batch
    xv = jnp.reshape(x, (B, (S * D) // c, c))            # free row-major view
    rb = _pick_row_block(p, c, itemsize,
                         min_blocks=max(1, _MIN_GRID_BLOCKS // B))
    out = pl.pallas_call(
        _clamp_kernel,
        out_shape=jax.ShapeDtypeStruct((B, p, c), x.dtype),
        grid_spec=pl.GridSpec(
            grid=(B, _cdiv(p, rb)),
            in_specs=[pl.BlockSpec((1, rb, c), lambda b, r: (b, r, 0))],
            out_specs=pl.BlockSpec((1, rb, c), lambda b, r: (b, r, 0)),
        ),
        compiler_params=pltpu.CompilerParams(
            dimension_semantics=("parallel", "parallel")),
    )(xv)
    return jnp.reshape(out, (B, rows, D))


def _clamp_prefix_fallback(x, rows):
    """Lane-sparse fallback for shapes whose prefix size is not 128-aligned:
    tile the natural (B, S, D) layout over rows (ragged edges are masked)."""
    B, S, D = x.shape
    itemsize = jnp.dtype(x.dtype).itemsize
    d_pad = _round_up(D, _LANE)          # VMEM tiles pad the lane dim to 128
    rt = max(_SUBLANE,
             _round_down(_TARGET_BLOCK_BYTES // (d_pad * itemsize), _SUBLANE))
    rt = min(rt, _round_up(rows, _SUBLANE))
    if rows == S and rows <= rt:
        rt = rows                        # single full-extent block, always legal
    return pl.pallas_call(
        _clamp_kernel,
        out_shape=jax.ShapeDtypeStruct((B, rows, D), x.dtype),
        grid_spec=pl.GridSpec(
            grid=(B, _cdiv(rows, rt)),
            in_specs=[pl.BlockSpec((1, rt, D), lambda b, r: (b, r, 0))],
            out_specs=pl.BlockSpec((1, rt, D), lambda b, r: (b, r, 0)),
        ),
        compiler_params=pltpu.CompilerParams(
            dimension_semantics=("parallel", "parallel")),
    )(x)


def _clamp_prefix(x, rows):
    """clamp(x[:, :rows, :], 0, 6), never materializing the row slice."""
    B, S, D = x.shape
    if rows == S:
        out = _clamp_full_flat(x)
        if out is not None:
            return out
        return _clamp_prefix_fallback(x, rows)
    c = _pick_lane_width([S * D, rows * D])
    if c is None:
        return _clamp_prefix_fallback(x, rows)
    return _clamp_prefix_aligned(x, rows, c)


# ---------------------------------------------------------------------------
# Boundary-crossing case: one kernel writes both parts at their final offsets
# ---------------------------------------------------------------------------
def _cat_clamp_aligned(x1, x2, L2, c):
    """clamp(cat(x1, x2[:, :L2]), 0, 6) in a single pallas_call: output blocks
    for x1 land at rows [0, rows1) and blocks for x2 at [rows1, rows1+rows2),
    so no concatenate copy is ever made."""
    B, S1, D = x1.shape
    _, S2, _ = x2.shape
    itemsize = jnp.dtype(x1.dtype).itemsize

    rows1 = (S1 * D) // c                # whole x1 (the slice covers all of it)
    rows2 = (L2 * D) // c                # x2 prefix
    rows_out = rows1 + rows2
    rb = _pick_dividing_row_block(rows1, c, itemsize)    # rb | rows1
    nblk1 = rows1 // rb
    nblk2 = _cdiv(rows2, rb)

    x1v = jnp.reshape(x1, (B, rows1, c))                 # free row-major views
    x2v = jnp.reshape(x2, (B, (S2 * D) // c, c))

    out = pl.pallas_call(
        functools.partial(_cat_clamp_kernel, nblk1=nblk1),
        out_shape=jax.ShapeDtypeStruct((B, rows_out, c), x1.dtype),
        grid_spec=pl.GridSpec(
            grid=(B, nblk1 + nblk2),
            in_specs=[
                # Pinned outside its own region -> Pallas skips the repeat DMA.
                pl.BlockSpec((1, rb, c),
                             lambda b, r: (b, jnp.minimum(r, nblk1 - 1), 0)),
                pl.BlockSpec((1, rb, c),
                             lambda b, r: (b, jnp.maximum(r - nblk1, 0), 0)),
            ],
            out_specs=pl.BlockSpec((1, rb, c), lambda b, r: (b, r, 0)),
        ),
        compiler_params=pltpu.CompilerParams(
            dimension_semantics=("parallel", "parallel")),
    )(x1v, x2v)
    return jnp.reshape(out, (B, S1 + L2, D))


# ---------------------------------------------------------------------------
# Forward
# ---------------------------------------------------------------------------
def model_forward(x1, x2, *, slice_end=SLICE_END):
    """Equivalent of Model.forward: clamp(cat((x1, x2), 1), 0, 6)[:, 0:slice_end]."""
    B, S1, D = x1.shape
    B2, S2, D2 = x2.shape
    assert B == B2 and D == D2, "cat(dim=1) requires matching batch/feature dims"

    L = min(slice_end, S1 + S2)   # python-style slice clamps to available length
    L1 = min(L, S1)               # rows taken from x1
    L2 = L - L1                   # rows taken from x2 (slice crosses the boundary)

    if L2 == 0:
        return _clamp_prefix(x1, L1)

    # The slice crosses the concat boundary (so L1 == S1).  Fuse both parts
    # into one kernel whose output blocks sit at their final row offsets.
    sizes = [S1 * D, S2 * D, L2 * D]
    if (S1 * D) % _SUBLANE == 0:
        sizes.append((S1 * D) // _SUBLANE)   # keep the boundary sublane-aligned
    c = _pick_lane_width(sizes)
    if c is not None and ((S1 * D) // c) % _SUBLANE == 0:
        return _cat_clamp_aligned(x1, x2, L2, c)

    # TODO(synk): unaligned boundary-crossing shapes keep one concatenate copy.
    return jnp.concatenate(
        [_clamp_prefix(x1, L1), _clamp_prefix(x2, L2)], axis=1)


def _reference(x1, x2, slice_end=SLICE_END):
    b = jnp.concatenate((x1, x2), axis=1)
    return jnp.clip(b, 0, 6)[:, 0:slice_end]


if __name__ == "__main__":
    key = jax.random.PRNGKey(0)
    k1, k2, k3, k4, k5, k6 = jax.random.split(key, 6)
    fwd = jax.jit(model_forward)

    # Case 1: shapes consistent with the module (seq len 4096 so the baked-in
    # [:, 0:4096] slice is meaningful); the whole output comes from x1.
    x1 = jax.random.normal(k1, (2, 4096, 16), dtype=jnp.float32) * 4.0
    x2 = jax.random.normal(k2, (2, 4096, 16), dtype=jnp.float32) * 4.0
    out = jax.block_until_ready(fwd(x1, x2))
    ref = _reference(x1, x2)
    assert out.shape == ref.shape == (2, 4096, 16), out.shape
    assert jnp.allclose(out, ref), "mismatch vs reference (case 1)"

    # Case 2: the slice crosses the concat boundary -> single fused kernel,
    # no concatenate copy.
    y1 = jax.random.normal(k3, (2, 2560, 16), dtype=jnp.float32) * 4.0
    y2 = jax.random.normal(k4, (2, 2048, 16), dtype=jnp.float32) * 4.0
    out2 = jax.block_until_ready(fwd(y1, y2))
    ref2 = _reference(y1, y2)
    assert out2.shape == ref2.shape == (2, 4096, 16), out2.shape
    assert jnp.allclose(out2, ref2), "mismatch vs reference (case 2)"

    # Case 3: small unaligned shapes exercise the lane-sparse fallback path.
    z1 = jax.random.normal(k5, (2, 20, 12), dtype=jnp.float32) * 4.0
    z2 = jax.random.normal(k6, (2, 12, 12), dtype=jnp.float32) * 4.0
    out3 = jax.block_until_ready(fwd(z1, z2))
    ref3 = _reference(z1, z2)
    assert out3.shape == ref3.shape == (2, 32, 12), out3.shape
    assert jnp.allclose(out3, ref3), "mismatch vs reference (case 3)"

    print("KERNEL_OK")
</pallas_src>

<mosaic_0001>
module attributes {stable_mosaic.version = 11 : i64} {
  func.func @_clamp_kernel(%arg0: i32, %arg1: memref<32x1024xf32, #tpu.memory_space<vmem>>, %arg2: memref<32x1024xf32, #tpu.memory_space<vmem>>) attributes {dimension_semantics = [#tpu.dimension_semantics<parallel>], iteration_bounds = array<i64: 4>, scalar_prefetch = 0 : i64, scratch_operands = 0 : i64, tpu.core_type = #tpu.core_type<tc>, window_params = [{transform_indices = @transform_0, window_bounds = array<i64: 32, 1024>}, {transform_indices = @transform_1, window_bounds = array<i64: 32, 1024>}]} {
    %c0 = arith.constant 0 : index
    %c0_0 = arith.constant 0 : index
    %0 = vector.load %arg1[%c0, %c0_0] : memref<32x1024xf32, #tpu.memory_space<vmem>>, vector<32x1024xf32>
    %c0_i32 = arith.constant 0 : i32
    %c6_i32 = arith.constant 6 : i32
    %1 = arith.sitofp %c0_i32 : i32 to f32
    %2 = vector.broadcast %1 : f32 to vector<32x1024xf32>
    %3 = arith.maximumf %2, %0 : vector<32x1024xf32>
    %4 = arith.sitofp %c6_i32 : i32 to f32
    %5 = vector.broadcast %4 : f32 to vector<32x1024xf32>
    %6 = arith.minimumf %5, %3 : vector<32x1024xf32>
    %c0_1 = arith.constant 0 : index
    %c0_2 = arith.constant 0 : index
    %7 = vector.load %arg2[%c0_1, %c0_2] : memref<32x1024xf32, #tpu.memory_space<vmem>>, vector<32x1024xf32>
    tpu.vector_store %arg2[%c0_1, %c0_2], %6 {strides = array<i32>} : memref<32x1024xf32, #tpu.memory_space<vmem>>, vector<32x1024xf32>,
    return
  }
  func.func @transform_0(%arg0: i32) -> (i32, i32) {
    %c0_i32 = arith.constant 0 : i32
    %c0_i32_0 = arith.constant 0 : i32
    return %arg0, %c0_i32 : i32, i32
  }
  func.func @transform_1(%arg0: i32) -> (i32, i32) {
    %c0_i32 = arith.constant 0 : i32
    %c0_i32_0 = arith.constant 0 : i32
    return %arg0, %c0_i32 : i32, i32
  }
}

</mosaic_0001>

<llo_original>
// kernel: model_forward.1
$region0: #{model_forward.1}
  #allocation0 [shape = 'u32[]', space=smem, size = 0x4, offset = 0x4, fixed_abs, tag = 'smem constant byte address 0x4 - core index']
  #allocation1 [shape = 'u32[144,128]{1,0:T(1,128)}', space=vmem, size = 0x12000, scoped, tag = 'internal scratch']
  %s0 = inlined_call_operand.vmem [shape: f32[128,1024], index: 0, kind: input, shape index: {}]
  %s1 = inlined_call_operand.vmem [shape: f32[128,1024], index: 1, kind: output, shape index: {}]
  %s2 = sld [smem:[#allocation0]]
  $region37: #{model_forward.1} parent=0
    _
  %s4 = ssub.s32 1, %s2
  %s5 = scalar_select 0, %s4, %s2
  loop: start=0, step=1, limit=6
  $region2: #{model_forward.1} parent=0 // loop_pre_header
    _
  $region3: #{model_forward.1} parent=0 // loop_header
    %s7 = sphi 0, %s11
    %p8 = scmp.ge.s32.totalorder %s7, 6
    %s17 = sphi 0, %s19
    %s20 = sphi 0, %s17
    %s21 = sphi 0, %s20
    %s37 = sphi 0, %s21
    %s43 = sphi 0, %s45
    %s46 = sphi 0, %s43
    %s47 = sphi 0, %s46
    %s63 = sphi 0, %s47
  $region4: #{model_forward.1} parent=0 // loop_header_branch
    %10 = sbr.rel (%p8) target = $region8
  $region5: #{model_forward.1} parent=0 // loop_body
    %s12 = ssub.s32 %s7, 1
    %s13 = ssub.s32 %s7, 2
    %s14 = sadd.s32 %s7, 1
    %s15 = ssub.s32 %s7, %s14
    %p16 = scmp.eq.s32.totalorder %s15, 0
    %s18 = sadd.s32 %s17, 1
    %s19 = scalar_select %p16, %s17, %s18
    %p22 = pneg %p16
    %p23 = scmp.eq.s32.totalorder %s7, 3
    %p24 = por %p22, %p23
    %p25 = scmp.ne.s32.totalorder %s17, %s20
    %p26 = scmp.eq.s32.totalorder %s7, 0
    %p27 = por %p25, %p26
    %p28 = scmp.ne.s32.totalorder %s17, %s20
    %p29 = scmp.eq.s32.totalorder %s12, 3
    %p30 = por %p28, %p29
    %p31 = scmp.ne.s32.totalorder %s20, %s21
    %p32 = scmp.eq.s32.totalorder %s12, 0
    %p33 = por %p31, %p32
    %p34 = scmp.ne.s32.totalorder %s20, %s21
    %p35 = scmp.eq.s32.totalorder %s13, 3
    %p36 = por %p34, %p35
    %p38 = scmp.ne.s32.totalorder %s21, %s37
    %p39 = scmp.eq.s32.totalorder %s13, 0
    %p40 = por %p38, %p39
    %s41 = ssub.s32 %s7, %s14
    %p42 = scmp.eq.s32.totalorder %s41, 0
    %s44 = sadd.s32 %s43, 1
    %s45 = scalar_select %p42, %s43, %s44
    %p48 = pneg %p42
    %p49 = scmp.eq.s32.totalorder %s7, 3
    %p50 = por %p48, %p49
    %p51 = scmp.ne.s32.totalorder %s43, %s46
    %p52 = scmp.eq.s32.totalorder %s7, 0
    %p53 = por %p51, %p52
    %p54 = scmp.ne.s32.totalorder %s43, %s46
    %p55 = scmp.eq.s32.totalorder %s12, 3
    %p56 = por %p54, %p55
    %p57 = scmp.ne.s32.totalorder %s46, %s47
    %p58 = scmp.eq.s32.totalorder %s12, 0
    %p59 = por %p57, %p58
    %p60 = scmp.ne.s32.totalorder %s46, %s47
    %p61 = scmp.eq.s32.totalorder %s13, 3
    %p62 = por %p60, %p61
    %p64 = scmp.ne.s32.totalorder %s47, %s63
    %p65 = scmp.eq.s32.totalorder %s13, 0
    %p66 = por %p64, %p65
    %p67 = scmp.le.s32.totalorder 1, %s7
    %p68 = scmp.lt.s32.totalorder %s7, 5
    %p69 = pnand %p67, %p68
    %p70 = pneg %p69
    // Predicated region
    $region9: #{model_forward.1} parent=5 // pred_check
      _
    $region10: #{model_forward.1} parent=5 // pred_check_branch
      %72 = sbr.rel (%p69) target = $region12
    $region11: #{model_forward.1} parent=5 // pred_region
      %s73 = ssub.s32 %s7, 1
    $region12: #{model_forward.1} parent=5 // pred_fallthru
      _
    %p74 = scmp.lt.s32.totalorder %s7, 4
    // Predicated region
    $region13: #{model_forward.1} parent=5 // pred_check
      %p75 = pneg %p74
    $region14: #{model_forward.1} parent=5 // pred_check_branch
      %77 = sbr.rel (%p75) target = $region16
    $region15: #{model_forward.1} parent=5 // pred_region
      // Predicated region
      $region17: #{model_forward.1} parent=15 // pred_check
        %p78 = pneg %p27
      $region18: #{model_forward.1} parent=15 // pred_check_branch
        %80 = sbr.rel (%p78) target = $region20
      $region19: #{model_forward.1} parent=15 // pred_region
        %s81 = smul.u32 4, %s7
        %p82 = scmp.lt.s32.totalorder %s81, 15
        %s83 = scalar_select %p82, %s81, 15
        %s84 = smul.addr %s83, 8
        %s85 = smul.addr %s84, 8
        %s86 = scalar_lea.vmem %s0, %s85
        %s87 = smul.u32 4, %s7
      $region20: #{model_forward.1} parent=15 // pred_fallthru
        _
    $region16: #{model_forward.1} parent=5 // pred_fallthru
      _
    %p88 = scmp.le.s32.totalorder 1, %s7
    %p89 = scmp.lt.s32.totalorder %s7, 5
    %p90 = pnand %p88, %p89
    %p91 = pneg %p90
    // Predicated region
    $region21: #{model_forward.1} parent=5 // pred_check
      _
    $region22: #{model_forward.1} parent=5 // pred_check_branch
      %93 = sbr.rel (%p90) target = $region24
    $region23: #{model_forward.1} parent=5 // pred_region
      %s94 = ssub.s32 %s7, 1
      %s95 = smul.u32 4, %s12
      %p96 = scmp.lt.s32.totalorder %s95, 15
      %s97 = scalar_select %p96, %s95, 15
      %s98 = smul.addr %s97, 8
      %s99 = smul.addr %s98, 8
      %s100 = scalar_lea.vmem %s0, %s99
      %p101 = pneg %p33
      %p102 = pneg %p30
      %p103 = pneg %p59
      %p104 = pneg %p56
      %s105 = smul.u32 4, %s12
      %p106 = scmp.lt.s32.totalorder %s105, 15
      %s107 = scalar_select %p106, %s105, 15
      %s108 = smul.addr %s107, 8
      %s109 = smul.addr %s108, 8
      %s110 = scalar_lea.vmem %s1, %s109
      %s111 = smul.u32 4, %s12
      %p112 = scmp.lt.s32.totalorder %s111, 15
      %s113 = scalar_select %p112, %s111, 15
      %s114 = smul.addr %s113, 8
      %s115 = smul.addr %s114, 8
      %s116 = scalar_lea.vmem %s0, %s115
      %s117 = smul.u32 4, %s12
      %s118 = smul.u32 4, %s12
      %p119 = scmp.lt.s32.totalorder %s118, 15
      %s120 = scalar_select %p119, %s118, 15
      %s121 = smul.addr %s120, 8
      %s122 = smul.addr %s121, 8
      %s123 = scalar_lea.vmem %s1, %s122
      %s124 = smul.u32 4, %s12
      %v125 = vld [vmem:[%s116] sm:$0xff]
      %v126 = vld [vmem:[%s116 + $0x8] sm:$0xff]
      %v127 = vld [vmem:[%s116 + $0x10] sm:$0xff]
      %v128 = vld [vmem:[%s116 + $0x18] sm:$0xff]
      %v129 = vld [vmem:[%s116 + $0x20] sm:$0xff]
      %v130 = vld [vmem:[%s116 + $0x28] sm:$0xff]
      %v131 = vld [vmem:[%s116 + $0x30] sm:$0xff]
      %v132 = vld [vmem:[%s116 + $0x38] sm:$0xff]
      %v133 = vld [vmem:[%s116 + $0x40] sm:$0xff]
      %v134 = vld [vmem:[%s116 + $0x48] sm:$0xff]
      %v135 = vld [vmem:[%s116 + $0x50] sm:$0xff]
      %v136 = vld [vmem:[%s116 + $0x58] sm:$0xff]
      %v137 = vld [vmem:[%s116 + $0x60] sm:$0xff]
      %v138 = vld [vmem:[%s116 + $0x68] sm:$0xff]
      %v139 = vld [vmem:[%s116 + $0x70] sm:$0xff]
      %v140 = vld [vmem:[%s116 + $0x78] sm:$0xff]
      %v141 = vld [vmem:[%s116 + $0x80] sm:$0xff]
      %v142 = vld [vmem:[%s116 + $0x88] sm:$0xff]
      %v143 = vld [vmem:[%s116 + $0x90] sm:$0xff]
      %v144 = vld [vmem:[%s116 + $0x98] sm:$0xff]
      %v145 = vld [vmem:[%s116 + $0xa0] sm:$0xff]
      %v146 = vld [vmem:[%s116 + $0xa8] sm:$0xff]
      %v147 = vld [vmem:[%s116 + $0xb0] sm:$0xff]
      %v148 = vld [vmem:[%s116 + $0xb8] sm:$0xff]
      %v149 = vld [vmem:[%s116 + $0xc0] sm:$0xff]
      %v150 = vld [vmem:[%s116 + $0xc8] sm:$0xff]
      %v151 = vld [vmem:[%s116 + $0xd0] sm:$0xff]
      %v152 = vld [vmem:[%s116 + $0xd8] sm:$0xff]
      %v153 = vld [vmem:[%s116 + $0xe0] sm:$0xff]
      %v154 = vld [vmem:[%s116 + $0xe8] sm:$0xff]
      %v155 = vld [vmem:[%s116 + $0xf0] sm:$0xff]
      %v156 = vld [vmem:[%s116 + $0xf8] sm:$0xff]
      %v157 = vmax.f32 %v125, 0.0
      %v158 = vmax.f32 %v126, 0.0
      %v159 = vmax.f32 %v127, 0.0
      %v160 = vmax.f32 %v128, 0.0
      %v161 = vmax.f32 %v129, 0.0
      %v162 = vmax.f32 %v130, 0.0
      %v163 = vmax.f32 %v131, 0.0
      %v164 = vmax.f32 %v132, 0.0
      %v165 = vmax.f32 %v133, 0.0
      %v166 = vmax.f32 %v134, 0.0
      %v167 = vmax.f32 %v135, 0.0
      %v168 = vmax.f32 %v136, 0.0
      %v169 = vmax.f32 %v137, 0.0
      %v170 = vmax.f32 %v138, 0.0
      %v171 = vmax.f32 %v139, 0.0
      %v172 = vmax.f32 %v140, 0.0
      %v173 = vmax.f32 %v141, 0.0
      %v174 = vmax.f32 %v142, 0.0
      %v175 = vmax.f32 %v143, 0.0
      %v176 = vmax.f32 %v144, 0.0
      %v177 = vmax.f32 %v145, 0.0
      %v178 = vmax.f32 %v146, 0.0
      %v179 = vmax.f32 %v147, 0.0
      %v180 = vmax.f32 %v148, 0.0
      %v181 = vmax.f32 %v149, 0.0
      %v182 = vmax.f32 %v150, 0.0
      %v183 = vmax.f32 %v151, 0.0
      %v184 = vmax.f32 %v152, 0.0
      %v185 = vmax.f32 %v153, 0.0
      %v186 = vmax.f32 %v154, 0.0
      %v187 = vmax.f32 %v155, 0.0
      %v188 = vmax.f32 %v156, 0.0
      %v189 = vmin.f32 %v157, 6.0
      %v190 = vmin.f32 %v158, 6.0
      %v191 = vmin.f32 %v159, 6.0
      %v192 = vmin.f32 %v160, 6.0
      %v193 = vmin.f32 %v161, 6.0
      %v194 = vmin.f32 %v162, 6.0
      %v195 = vmin.f32 %v163, 6.0
      %v196 = vmin.f32 %v164, 6.0
      %v197 = vmin.f32 %v165, 6.0
      %v198 = vmin.f32 %v166, 6.0
      %v199 = vmin.f32 %v167, 6.0
      %v200 = vmin.f32 %v168, 6.0
      %v201 = vmin.f32 %v169, 6.0
      %v202 = vmin.f32 %v170, 6.0
      %v203 = vmin.f32 %v171, 6.0
      %v204 = vmin.f32 %v172, 6.0
      %v205 = vmin.f32 %v173, 6.0
      %v206 = vmin.f32 %v174, 6.0
      %v207 = vmin.f32 %v175, 6.0
      %v208 = vmin.f32 %v176, 6.0
      %v209 = vmin.f32 %v177, 6.0
      %v210 = vmin.f32 %v178, 6.0
      %v211 = vmin.f32 %v179, 6.0
      %v212 = vmin.f32 %v180, 6.0
      %v213 = vmin.f32 %v181, 6.0
      %v214 = vmin.f32 %v182, 6.0
      %v215 = vmin.f32 %v183, 6.0
      %v216 = vmin.f32 %v184, 6.0
      %v217 = vmin.f32 %v185, 6.0
      %v218 = vmin.f32 %v186, 6.0
      %v219 = vmin.f32 %v187, 6.0
      %v220 = vmin.f32 %v188, 6.0
      %221 = vst [vmem:[%s123] sm:$0xff] %v189
      %222 = vst [vmem:[%s123 + $0x8] sm:$0xff] %v190
      %223 = vst [vmem:[%s123 + $0x10] sm:$0xff] %v191
      %224 = vst [vmem:[%s123 + $0x18] sm:$0xff] %v192
      %225 = vst [vmem:[%s123 + $0x20] sm:$0xff] %v193
      %226 = vst [vmem:[%s123 + $0x28] sm:$0xff] %v194
      %227 = vst [vmem:[%s123 + $0x30] sm:$0xff] %v195
      %228 = vst [vmem:[%s123 + $0x38] sm:$0xff] %v196
      %229 = vst [vmem:[%s123 + $0x40] sm:$0xff] %v197
      %230 = vst [vmem:[%s123 + $0x48] sm:$0xff] %v198
      %231 = vst [vmem:[%s123 + $0x50] sm:$0xff] %v199
      %232 = vst [vmem:[%s123 + $0x58] sm:$0xff] %v200
      %233 = vst [vmem:[%s123 + $0x60] sm:$0xff] %v201
      %234 = vst [vmem:[%s123 + $0x68] sm:$0xff] %v202
      %235 = vst [vmem:[%s123 + $0x70] sm:$0xff] %v203
      %236 = vst [vmem:[%s123 + $0x78] sm:$0xff] %v204
      %237 = vst [vmem:[%s123 + $0x80] sm:$0xff] %v205
      %238 = vst [vmem:[%s123 + $0x88] sm:$0xff] %v206
      %239 = vst [vmem:[%s123 + $0x90] sm:$0xff] %v207
      %240 = vst [vmem:[%s123 + $0x98] sm:$0xff] %v208
      %241 = vst [vmem:[%s123 + $0xa0] sm:$0xff] %v209
      %242 = vst [vmem:[%s123 + $0xa8] sm:$0xff] %v210
      %243 = vst [vmem:[%s123 + $0xb0] sm:$0xff] %v211
      %244 = vst [vmem:[%s123 + $0xb8] sm:$0xff] %v212
      %245 = vst [vmem:[%s123 + $0xc0] sm:$0xff] %v213
      %246 = vst [vmem:[%s123 + $0xc8] sm:$0xff] %v214
      %247 = vst [vmem:[%s123 + $0xd0] sm:$0xff] %v215
      %248 = vst [vmem:[%s123 + $0xd8] sm:$0xff] %v216
      %249 = vst [vmem:[%s123 + $0xe0] sm:$0xff] %v217
      %250 = vst [vmem:[%s123 + $0xe8] sm:$0xff] %v218
      %251 = vst [vmem:[%s123 + $0xf0] sm:$0xff] %v219
      %252 = vst [vmem:[%s123 + $0xf8] sm:$0xff] %v220
      %s253 = smul.u32 4, %s12
      %p254 = scmp.lt.s32.totalorder %s253, 15
      %s255 = scalar_select %p254, %s253, 15
      %s256 = smul.addr %s255, 8
      %s257 = smul.addr %s256, 8
      %s258 = scalar_lea.vmem %s1, %s257
      // Predicated region
      $region25: #{model_forward.1} parent=23 // pred_check
        %p259 = pneg %p56
      $region26: #{model_forward.1} parent=23 // pred_check_branch
        %261 = sbr.rel (%p259) target = $region28
      $region27: #{model_forward.1} parent=23 // pred_region
        %s262 = smul.u32 4, %s12
      $region28: #{model_forward.1} parent=23 // pred_fallthru
        _
    $region24: #{model_forward.1} parent=5 // pred_fallthru
      _
    %p263 = scmp.le.s32.totalorder 2, %s7
    // Predicated region
    $region29: #{model_forward.1} parent=5 // pred_check
      %p264 = pneg %p263
    $region30: #{model_forward.1} parent=5 // pred_check_branch
      %266 = sbr.rel (%p264) target = $region32
    $region31: #{model_forward.1} parent=5 // pred_region
      %s267 = ssub.s32 %s7, 2
      // Predicated region
      $region33: #{model_forward.1} parent=31 // pred_check
        %p268 = pneg %p62
      $region34: #{model_forward.1} parent=31 // pred_check_branch
        %270 = sbr.rel (%p268) target = $region36
      $region35: #{model_forward.1} parent=31 // pred_region
        %s271 = smul.u32 4, %s13
        %p272 = scmp.lt.s32.totalorder %s271, 15
        %s273 = scalar_select %p272, %s271, 15
        %s274 = smul.addr %s273, 8
        %s275 = smul.addr %s274, 8
        %s276 = scalar_lea.vmem %s1, %s275
      $region36: #{model_forward.1} parent=31 // pred_fallthru
        _
    $region32: #{model_forward.1} parent=5 // pred_fallthru
      _
  $region6: #{model_forward.1} parent=0 // loop_footer
    %s11 = sadd.s32 1, %s7
  $region7: #{model_forward.1} parent=0 // loop_footer_branch
    %6 = sbr.rel target = $region3
  $region8: #{model_forward.1} parent=0 // loop_exit
    _

</llo_original>
